<compile_context>
chip_gen: v7x
topology: tpu7x:2x2x1
jax: 0.10.0
libtpu: 0.0.40
codegen_flags: <defaults>
</compile_context>

<pallas_src>
import math

import jax
import jax.numpy as jnp
from jax.experimental import pallas as pl
from jax.experimental.pallas import tpu as pltpu


def _standardize_kernel(x_ref, mu_ref, inv_ref, o_ref):
    # One vsub + one vmul per vreg; params are a (1, W) row broadcast over rows.
    cd = mu_ref.dtype
    x = x_ref[...].astype(cd)
    o_ref[...] = ((x - mu_ref[...]) * inv_ref[...]).astype(o_ref.dtype)


def _vmem_capacity_bytes():
    try:
        return int(pltpu.get_tpu_info().vmem_capacity_bytes)
    except Exception:
        return 64 * 1024 * 1024  # conservative (v7x-sized)


def _compute_dtype(x_dtype):
    # bf16 math is fine on v6e/v7x; v5e has no bf16 VALU/EUP -> keep f32 there.
    if x_dtype == jnp.bfloat16:
        try:
            kind = jax.devices()[0].device_kind.lower()
        except Exception:
            kind = ""
        if "v5" in kind:
            return jnp.float32
        return jnp.bfloat16
    return jnp.float32


def _choose_fold(M, F):
    """Rows folded into the lane axis so the last dim becomes a multiple of 128."""
    if F % 128 == 0 or M <= 1:
        return 1
    base = 128 // math.gcd(F, 128)  # smallest r with (r*F) % 128 == 0
    if M % base != 0:
        return 1
    r = base
    target_lanes = 2048             # widen toward 512-2048 lanes
    while (2 * r * F) <= target_lanes and M % (2 * r) == 0:
        r *= 2
    return r


def standardize(x, mean, stddev, eps=1e-9):
    """Pallas implementation of Standardize: (x - mean) / (stddev + eps)."""
    x = jnp.asarray(x)
    orig_shape = x.shape
    F = int(orig_shape[-1])
    M = int(math.prod(orig_shape[:-1]))  # flattened leading dims (1 if 1-D)

    cd = _compute_dtype(x.dtype)

    # Per-feature params, prepared once in exact f32 (hoisted out of the kernel).
    mu = jnp.broadcast_to(jnp.asarray(mean, jnp.float32), (F,))
    inv = 1.0 / (jnp.broadcast_to(jnp.asarray(stddev, jnp.float32), (F,)) +
                 jnp.float32(eps))

    # Lane-dense fold: last dim becomes W = r*F (multiple of 128 when folded).
    r = _choose_fold(M, F)
    M2, W = M // r, r * F
    x2 = x.reshape(M2, W)
    mu2 = jnp.tile(mu, r).reshape(1, W).astype(cd)
    inv2 = jnp.tile(inv, r).reshape(1, W).astype(cd)

    itemsize = x2.dtype.itemsize
    sub = max(8, 32 // itemsize)                 # sublane packing: 8 f32 / 16 bf16 / 32 i8
    w_pad = ((W + 127) // 128) * 128             # real VMEM lane padding

    # Generation-aware block sizing: ~4 resident tiles (double-buffered in + out).
    vmem_cap = _vmem_capacity_bytes()
    tile_budget = 8 * 1024 * 1024 if vmem_cap >= 96 * 1024 * 1024 else 6 * 1024 * 1024
    bytes_per_row = w_pad * itemsize
    rows_fit = max(sub, tile_budget // bytes_per_row)

    total_bytes = M2 * W * itemsize
    if total_bytes <= (1 << 20) or M2 <= 2 * sub:
        # Small problem: grid-step overhead would dominate; single block.
        block_rows = M2
    else:
        # Aim for >= 8 grid steps so both v7x TensorCores get work, while each
        # block still moves multiple MiB where the array is big enough.
        rows_for_steps = -(-M2 // 8)
        block_rows = min(rows_fit, rows_for_steps, M2)
        block_rows = max(sub, (block_rows // sub) * sub)

    grid = (pl.cdiv(M2, block_rows),)

    # VMEM footprint from the actual (lane-padded) tiles + param rows.
    footprint = (4 * block_rows * w_pad * itemsize
                 + 4 * w_pad * jnp.dtype(cd).itemsize)
    vmem_limit = int(min(max(footprint + (4 << 20), 16 << 20),
                         max(32 << 20, vmem_cap // 2)))

    out = pl.pallas_call(
        _standardize_kernel,
        out_shape=jax.ShapeDtypeStruct((M2, W), x.dtype),
        grid=grid,
        in_specs=[
            pl.BlockSpec((block_rows, W), lambda i: (i, 0)),   # input tile
            pl.BlockSpec((1, W), lambda i: (0, 0)),            # mean (tiled)
            pl.BlockSpec((1, W), lambda i: (0, 0)),            # 1/(std+eps) (tiled)
        ],
        out_specs=pl.BlockSpec((block_rows, W), lambda i: (i, 0)),
        compiler_params=pltpu.CompilerParams(
            dimension_semantics=("parallel",),                 # megacore-shardable
            vmem_limit_bytes=vmem_limit,
        ),
    )(x2, mu2, inv2)

    return out.reshape(orig_shape)


if __name__ == "__main__":
    key = jax.random.PRNGKey(0)
    k1, k2, k3 = jax.random.split(key, 3)

    # (batch, atoms, features) — typical schnetpack layout.
    B, N, F = 2, 8, 32
    x = jax.random.normal(k1, (B, N, F), dtype=jnp.float32)
    mean = jax.random.normal(k2, (F,), dtype=jnp.float32)
    stddev = jax.random.uniform(k3, (F,), dtype=jnp.float32, minval=0.5, maxval=2.0)
    eps = 1e-9

    out = standardize(x, mean, stddev, eps)
    jax.block_until_ready(out)
    ref = (x - mean) / (stddev + eps)
    assert out.shape == x.shape
    assert jnp.allclose(out, ref, atol=1e-5, rtol=1e-5), "standardize mismatch"

    # Fold-fallback path (leading-dim count not divisible by the lane-fold factor).
    x_odd = jax.random.normal(k1, (3, 5, F), dtype=jnp.float32)
    out_odd = standardize(x_odd, mean, stddev, eps)
    jax.block_until_ready(out_odd)
    ref_odd = (x_odd - mean) / (stddev + eps)
    assert jnp.allclose(out_odd, ref_odd, atol=1e-5, rtol=1e-5), "fallback mismatch"

    # Multi-block path (grid > 1) with a ragged trailing block.
    F2 = 64
    k4, k5 = jax.random.split(k2)
    x_big = jax.random.normal(k1, (5, 1700, F2), dtype=jnp.float32)
    mean_big = jax.random.normal(k4, (F2,), dtype=jnp.float32)
    std_big = jax.random.uniform(k5, (F2,), dtype=jnp.float32, minval=0.5, maxval=2.0)
    out_big = standardize(x_big, mean_big, std_big, eps)
    jax.block_until_ready(out_big)
    ref_big = (x_big - mean_big) / (std_big + eps)
    assert jnp.allclose(out_big, ref_big, atol=1e-5, rtol=1e-5), "tiled mismatch"

    print("KERNEL_OK")
</pallas_src>

<mosaic_0001>
module attributes {stable_mosaic.version = 11 : i64} {
  func.func @_standardize_kernel(%arg0: i32, %arg1: memref<1x512xf32, #tpu.memory_space<vmem>>, %arg2: memref<1x512xf32, #tpu.memory_space<vmem>>, %arg3: memref<1x512xf32, #tpu.memory_space<vmem>>, %arg4: memref<1x512xf32, #tpu.memory_space<vmem>>) attributes {dimension_semantics = [#tpu.dimension_semantics<parallel>], iteration_bounds = array<i64: 1>, scalar_prefetch = 0 : i64, scratch_operands = 0 : i64, tpu.core_type = #tpu.core_type<tc>, window_params = [{transform_indices = @transform_0, window_bounds = array<i64: 1, 512>}, {pipeline_mode = #tpu.pipeline_mode<synchronous>, transform_indices = @transform_1, window_bounds = array<i64: 1, 512>}, {pipeline_mode = #tpu.pipeline_mode<synchronous>, transform_indices = @transform_2, window_bounds = array<i64: 1, 512>}, {transform_indices = @transform_3, window_bounds = array<i64: 1, 512>}]} {
    %c0 = arith.constant 0 : index
    %c0_0 = arith.constant 0 : index
    %0 = vector.load %arg1[%c0, %c0_0] : memref<1x512xf32, #tpu.memory_space<vmem>>, vector<1x512xf32>
    %c0_1 = arith.constant 0 : index
    %c0_2 = arith.constant 0 : index
    %1 = vector.load %arg2[%c0_1, %c0_2] : memref<1x512xf32, #tpu.memory_space<vmem>>, vector<1x512xf32>
    %2 = arith.subf %0, %1 : vector<1x512xf32>
    %c0_3 = arith.constant 0 : index
    %c0_4 = arith.constant 0 : index
    %3 = vector.load %arg3[%c0_3, %c0_4] : memref<1x512xf32, #tpu.memory_space<vmem>>, vector<1x512xf32>
    %4 = arith.mulf %2, %3 : vector<1x512xf32>
    %c0_5 = arith.constant 0 : index
    %c0_6 = arith.constant 0 : index
    %5 = vector.load %arg4[%c0_5, %c0_6] : memref<1x512xf32, #tpu.memory_space<vmem>>, vector<1x512xf32>
    tpu.vector_store %arg4[%c0_5, %c0_6], %4 {strides = array<i32>} : memref<1x512xf32, #tpu.memory_space<vmem>>, vector<1x512xf32>,
    return
  }
  func.func @transform_0(%arg0: i32) -> (i32, i32) {
    %c0_i32 = arith.constant 0 : i32
    %c0_i32_0 = arith.constant 0 : i32
    return %arg0, %c0_i32 : i32, i32
  }
  func.func @transform_1(%arg0: i32) -> (i32, i32) {
    %c0_i32 = arith.constant 0 : i32
    %c0_i32_0 = arith.constant 0 : i32
    %c0_i32_1 = arith.constant 0 : i32
    return %c0_i32, %c0_i32_0 : i32, i32
  }
  func.func @transform_2(%arg0: i32) -> (i32, i32) {
    %c0_i32 = arith.constant 0 : i32
    %c0_i32_0 = arith.constant 0 : i32
    %c0_i32_1 = arith.constant 0 : i32
    return %c0_i32, %c0_i32_0 : i32, i32
  }
  func.func @transform_3(%arg0: i32) -> (i32, i32) {
    %c0_i32 = arith.constant 0 : i32
    %c0_i32_0 = arith.constant 0 : i32
    return %arg0, %c0_i32 : i32, i32
  }
}

</mosaic_0001>

<llo_original>
// kernel: tpu_custom_call.1
$region0: #{tpu_custom_call.1}
  #allocation0 [shape = 'u32[]', space=smem, size = 0x4, offset = 0x4, fixed_abs, tag = 'smem constant byte address 0x4 - core index']
  #allocation1 [shape = 'u32[144,128]{1,0:T(1,128)}', space=vmem, size = 0x12000, scoped, tag = 'internal scratch']
  %s0 = inlined_call_operand.hbm [shape: f32[1,512], index: 0, kind: input, shape index: {}]
  %s1 = inlined_call_operand.hbm [shape: f32[1,512], index: 1, kind: input, shape index: {}]
  %s2 = inlined_call_operand.vmem [shape: f32[1,512], index: 2, kind: input, shape index: {}]
  %s3 = inlined_call_operand.hbm [shape: f32[1,512], index: 3, kind: output, shape index: {}]
  %s4 = sld [smem:[#allocation0]]
  $region30: #{tpu_custom_call.1} parent=0
    _
  %s6 = ssub.s32 1, %s4
  %s7 = scalar_select 0, %s6, %s4
  $region1: #{tpu_custom_call.1} parent=0
    #allocation2 [shape = 'u8[2048]{0}', space=vmem, size = 0x800, scoped, tag = 'input window, operand 0, single buffered']
    #allocation3 [shape = 's32[1]{0}', space=sflag, size = 0x4, scoped, tag = 'scoped memory for tpu_custom_call.1']
    #allocation4 [shape = 's32[1]{0}', space=sflag, size = 0x4, scoped, tag = 'scoped memory for tpu_custom_call.1']
    #allocation5 [shape = 'u8[2048]{0}', space=vmem, size = 0x800, scoped, tag = 'input window, operand 1, single buffered']
    #allocation6 [shape = 's32[1]{0}', space=sflag, size = 0x4, scoped, tag = 'scoped memory for tpu_custom_call.1']
    #allocation7 [shape = 'u8[2048]{0}', space=vmem, size = 0x800, scoped, tag = 'output window, operand 0, single buffered']
    %8 = vsyncpa [#allocation3], 0
    %9 = vsyncpa [#allocation6], 0
    %10 = vsyncpa [#allocation4], 0
    // Predicated region
    $region2: #{tpu_custom_call.1} parent=1 // pred_check
      _
    $region3: #{tpu_custom_call.1} parent=1 // pred_check_branch
      %12 = sbr.rel (0) target = $region5
    $region4: #{tpu_custom_call.1} parent=1 // pred_region
      %s14 = ssub.s32 64, 64
      %15 = vsyncadd [#allocation3], %s14
      %s17 = sshll.u32 [#allocation2], 4
      %s18 = int_to_ptr.vmem [resolvable:$true] %s17
      %20 = dma.hbm_to_vmem [thread:$0]  %s0, 64, %s18, [#allocation3]
    $region5: #{tpu_custom_call.1} parent=1 // pred_fallthru
      _
    // Predicated region
    $region6: #{tpu_custom_call.1} parent=1 // pred_check
      _
    $region7: #{tpu_custom_call.1} parent=1 // pred_check_branch
      %22 = sbr.rel (0) target = $region9
    $region8: #{tpu_custom_call.1} parent=1 // pred_region
      %s24 = ssub.s32 64, 64
      %25 = vsyncadd [#allocation6], %s24
      %s27 = sshll.u32 [#allocation5], 4
      %s28 = int_to_ptr.vmem [resolvable:$true] %s27
      %30 = dma.hbm_to_vmem [thread:$0]  %s1, 64, %s28, [#allocation6]
    $region9: #{tpu_custom_call.1} parent=1 // pred_fallthru
      _
    // Predicated region
    $region10: #{tpu_custom_call.1} parent=1 // pred_check
      _
    $region11: #{tpu_custom_call.1} parent=1 // pred_check_branch
      %32 = sbr.rel (0) target = $region13
    $region12: #{tpu_custom_call.1} parent=1 // pred_region
      _
    $region13: #{tpu_custom_call.1} parent=1 // pred_fallthru
      _
    // Predicated region
    $region14: #{tpu_custom_call.1} parent=1 // pred_check
      _
    $region15: #{tpu_custom_call.1} parent=1 // pred_check_branch
      %34 = sbr.rel (0) target = $region17
    $region16: #{tpu_custom_call.1} parent=1 // pred_region
      %35 = dma.done [#allocation3], 64
    $region17: #{tpu_custom_call.1} parent=1 // pred_fallthru
      _
    // Predicated region
    $region18: #{tpu_custom_call.1} parent=1 // pred_check
      _
    $region19: #{tpu_custom_call.1} parent=1 // pred_check_branch
      %37 = sbr.rel (0) target = $region21
    $region20: #{tpu_custom_call.1} parent=1 // pred_region
      %38 = dma.done [#allocation6], 64
    $region21: #{tpu_custom_call.1} parent=1 // pred_fallthru
      _
    %v39 = vld [vmem:[#allocation2] sm:$0xf]
    %v40 = vld [vmem:[#allocation5] sm:$0xf]
    %v41 = vsub.f32 %v39, %v40
    %v42 = vld [vmem:[%s2] sm:$0xf]
    %v43 = vmul.f32 %v41, %v42
    %v44 = vlaneseq
    %vm45 = vcmp.ge.s32.totalorder %v44, 0
    %vm46 = vcmp.lt.s32.totalorder %v44, 512
    %vm47 = vmand %vm45, %vm46
    %48 = vst.msk [vmem:[#allocation7] sm:$0xf] %vm47, %v43
    // Predicated region
    $region22: #{tpu_custom_call.1} parent=1 // pred_check
      _
    $region23: #{tpu_custom_call.1} parent=1 // pred_check_branch
      %50 = sbr.rel (0) target = $region25
    $region24: #{tpu_custom_call.1} parent=1 // pred_region
      %s52 = ssub.s32 64, 64
      %53 = vsyncadd [#allocation4], %s52
      %s55 = sshll.u32 [#allocation7], 4
      %s56 = int_to_ptr.vmem [resolvable:$true] %s55
      %58 = dma.vmem_to_hbm [thread:$0]  %s56, 64, %s3, [#allocation4]
    $region25: #{tpu_custom_call.1} parent=1 // pred_fallthru
      _
    // Predicated region
    $region26: #{tpu_custom_call.1} parent=1 // pred_check
      _
    $region27: #{tpu_custom_call.1} parent=1 // pred_check_branch
      %60 = sbr.rel (0) target = $region29
    $region28: #{tpu_custom_call.1} parent=1 // pred_region
      %61 = dma.done [#allocation4], 64
    $region29: #{tpu_custom_call.1} parent=1 // pred_fallthru
      _
    %62 = vsyncpa [#allocation3], 1
    %63 = vsyncpa [#allocation6], 1
    %64 = vsyncpa [#allocation4], 1

</llo_original>
